<compile_context>
chip_gen: v6e
topology: v6e:2x2x1
jax: 0.10.0
libtpu: 0.0.40
codegen_flags: <defaults>
</compile_context>

<pallas_src>
import functools

import jax
import jax.numpy as jnp
from jax.experimental import pallas as pl
from jax.experimental.pallas import tpu as pltpu


def _align_up(x, m):
    return ((x + m - 1) // m) * m


def _quadruplet_loss_kernel(a_ref, p_ref, n1_ref, n2_ref, out_ref,
                            *, margin1, margin2, eps, block_rows, batch,
                            need_mask):
    # Upcast (supports bf16 inputs; f32 math matches the PyTorch reference).
    a = a_ref[...].astype(jnp.float32)
    p = p_ref[...].astype(jnp.float32)
    n1 = n1_ref[...].astype(jnp.float32)
    n2 = n2_ref[...].astype(jnp.float32)

    # F.pairwise_distance(x, y) = ||x - y + eps||_2 over the last dim; the
    # module squares it, so squared distance = sum((x - y + eps)^2, -1).
    # Three diffs + squares (VPU) + three lane reductions (XLU) stay hidden
    # under the DMA stream.
    d_ap = jnp.sum((a - p + eps) ** 2, axis=-1, keepdims=True)        # (TB, 1)
    d_an1 = jnp.sum((a - n1 + eps) ** 2, axis=-1, keepdims=True)      # (TB, 1)
    d_n1n2 = jnp.sum((n1 - n2 + eps) ** 2, axis=-1, keepdims=True)    # (TB, 1)

    loss = (jnp.maximum(d_ap - d_an1 + margin1, 0.0)
            + jnp.maximum(d_ap - d_n1n2 + margin2, 0.0))              # (TB, 1)

    if need_mask:
        # Mask rows that fall past the true batch size in the last tile
        # (applied after the hinge so padded garbage cannot propagate).
        rows = (pl.program_id(0) * block_rows
                + jax.lax.broadcasted_iota(jnp.int32, loss.shape, 0))
        loss = jnp.where(rows < batch, loss, 0.0)

    # Lane-dense (1, 128) output block: full-width unmasked vector store
    # instead of a (1,1) masked store.  The wrapper reads lane 0 per tile.
    out_ref[...] = jnp.full((1, 128), jnp.sum(loss), dtype=jnp.float32)


def quadruplet_loss(anchor, positive, negative1, negative2,
                    margin1=2.0, margin2=1.0, eps=1e-6, block_rows=None):
    """Scalar float32 loss matching QuadrupletLoss.forward (margins 2.0, 1.0).

    bf16 inputs are supported (and recommended for large batches): the kernel
    upcasts to f32 internally, preserving reduction accuracy while halving
    HBM traffic on this bandwidth-bound op.
    """
    B, D = anchor.shape
    itemsize = jnp.dtype(anchor.dtype).itemsize
    # Dtype-native sublane multiple: 8 for f32, 16 for bf16, 32 for int8/fp8.
    sub = max(8, 32 // itemsize)

    if block_rows is None:
        # Target ~2 MiB per input tile: 4 streams x 2 buffers ~= 16 MiB VMEM,
        # comfortably under the scoped limits on v5e/v6e/v7x once we pass an
        # explicit vmem_limit_bytes below.  Cap at 4096 rows.
        vmem_budget = 16 * 1024 * 1024
        cap = (vmem_budget // (4 * 2 * D * itemsize)) // sub * sub
        cap = max(sub, min(4096, cap))
        if B <= sub:
            block_rows = B                       # tiny batch: one full block
        else:
            # Guarantee >= 2 tiles (prefer an even count) so v7x's two
            # TensorCores both get balanced work under "parallel" semantics.
            num_tiles = max(2, pl.cdiv(B, cap))
            if num_tiles % 2:
                num_tiles += 1
            block_rows = min(cap, _align_up(pl.cdiv(B, num_tiles), sub))
            block_rows = max(sub, block_rows)
    else:
        block_rows = int(block_rows)
        if block_rows >= B:
            block_rows = B
        else:
            block_rows = max(8, (block_rows // 8) * 8)

    num_tiles = pl.cdiv(B, block_rows)
    need_mask = (B % block_rows) != 0

    tile_bytes = block_rows * D * itemsize
    # In the tiny-tile multi-step regime, deepen the pipeline to hide DMA
    # latency at step boundaries (costs only a little extra VMEM).
    use_buffered = (num_tiles >= 3) and (tile_bytes < 512 * 1024)
    n_buf = 3 if use_buffered else 2
    vmem_limit = int(max(16 << 20,
                         min(40 << 20, 4 * n_buf * tile_bytes + (4 << 20))))

    kernel = functools.partial(
        _quadruplet_loss_kernel,
        margin1=float(margin1), margin2=float(margin2), eps=float(eps),
        block_rows=block_rows, batch=B, need_mask=need_mask)

    cost = pl.CostEstimate(
        flops=12 * B * D,
        transcendentals=0,
        bytes_accessed=4 * B * D * itemsize + num_tiles * 512)

    def _call(buffered):
        if buffered:
            in_spec = pl.BlockSpec((block_rows, D), lambda i: (i, 0),
                                   pipeline_mode=pl.Buffered(3))
        else:
            in_spec = pl.BlockSpec((block_rows, D), lambda i: (i, 0))
        return pl.pallas_call(
            kernel,
            out_shape=jax.ShapeDtypeStruct((num_tiles, 128), jnp.float32),
            grid_spec=pltpu.PrefetchScalarGridSpec(
                num_scalar_prefetch=0,
                grid=(num_tiles,),
                in_specs=[in_spec, in_spec, in_spec, in_spec],
                out_specs=pl.BlockSpec((1, 128), lambda i: (i, 0)),
            ),
            compiler_params=pltpu.CompilerParams(
                dimension_semantics=("parallel",),
                vmem_limit_bytes=vmem_limit),
            cost_estimate=cost,
        )(anchor, positive, negative1, negative2)

    if use_buffered:
        try:
            partials = _call(True)
        except Exception:  # fall back to default double-buffering if needed
            partials = _call(False)
    else:
        partials = _call(False)

    # Finalize: mean over the true batch, then /2 (same scale as triplet loss).
    return jnp.sum(partials[:, 0]) / (B * 2.0)


def _ref(a, p, n1, n2, m1=2.0, m2=1.0, eps=1e-6):
    d_ap = jnp.sum((a - p + eps) ** 2, axis=-1, keepdims=True)
    d_an1 = jnp.sum((a - n1 + eps) ** 2, axis=-1, keepdims=True)
    d_n1n2 = jnp.sum((n1 - n2 + eps) ** 2, axis=-1, keepdims=True)
    l = (jnp.maximum(d_ap - d_an1 + m1, 0.0)
         + jnp.maximum(d_ap - d_n1n2 + m2, 0.0))
    return jnp.mean(l) / 2.0


if __name__ == "__main__":
    key = jax.random.PRNGKey(0)

    # Case 1: small, single-tile path (B <= sublane multiple).
    B, D = 8, 128
    ka, kp, kn1, kn2 = jax.random.split(key, 4)
    anchor = jax.random.normal(ka, (B, D), dtype=jnp.float32)
    positive = jax.random.normal(kp, (B, D), dtype=jnp.float32)
    negative1 = jax.random.normal(kn1, (B, D), dtype=jnp.float32)
    negative2 = jax.random.normal(kn2, (B, D), dtype=jnp.float32)

    loss = quadruplet_loss(anchor, positive, negative1, negative2)
    jax.block_until_ready(loss)
    expected = _ref(anchor, positive, negative1, negative2)
    assert jnp.allclose(loss, expected, rtol=1e-5, atol=1e-5), (loss, expected)

    # Case 2: explicit small tiles -> multi-tile, masked last tile, deep
    # (3-buffer) pipeline path.
    B2 = 20
    kb = jax.random.split(key, 8)
    a2 = jax.random.normal(kb[4], (B2, D), dtype=jnp.float32)
    p2 = jax.random.normal(kb[5], (B2, D), dtype=jnp.float32)
    n12 = jax.random.normal(kb[6], (B2, D), dtype=jnp.float32)
    n22 = jax.random.normal(kb[7], (B2, D), dtype=jnp.float32)

    loss2 = quadruplet_loss(a2, p2, n12, n22, block_rows=8)  # 3 tiles, masked
    jax.block_until_ready(loss2)
    expected2 = _ref(a2, p2, n12, n22)
    assert jnp.allclose(loss2, expected2, rtol=1e-5, atol=1e-5), (loss2, expected2)

    # Case 3: bf16 inputs, default heuristic -> 2 balanced tiles (megacore
    # split), 16-row sublane alignment, masked partial second tile.
    B3, D3 = 48, 256
    kc = jax.random.split(jax.random.PRNGKey(1), 4)
    a3 = jax.random.normal(kc[0], (B3, D3), dtype=jnp.bfloat16)
    p3 = jax.random.normal(kc[1], (B3, D3), dtype=jnp.bfloat16)
    n13 = jax.random.normal(kc[2], (B3, D3), dtype=jnp.bfloat16)
    n23 = jax.random.normal(kc[3], (B3, D3), dtype=jnp.bfloat16)

    loss3 = quadruplet_loss(a3, p3, n13, n23)
    jax.block_until_ready(loss3)
    expected3 = _ref(a3.astype(jnp.float32), p3.astype(jnp.float32),
                     n13.astype(jnp.float32), n23.astype(jnp.float32))
    assert jnp.allclose(loss3, expected3, rtol=2e-5, atol=1e-4), (loss3, expected3)

    print("KERNEL_OK")
</pallas_src>

<mosaic_0001>
module attributes {stable_mosaic.version = 11 : i64} {
  func.func @_quadruplet_loss_kernel(%arg0: i32, %arg1: memref<8x128xf32, #tpu.memory_space<vmem>>, %arg2: memref<8x128xf32, #tpu.memory_space<vmem>>, %arg3: memref<8x128xf32, #tpu.memory_space<vmem>>, %arg4: memref<8x128xf32, #tpu.memory_space<vmem>>, %arg5: memref<1x128xf32, #tpu.memory_space<vmem>>) attributes {dimension_semantics = [#tpu.dimension_semantics<parallel>], iteration_bounds = array<i64: 1>, scalar_prefetch = 0 : i64, scratch_operands = 0 : i64, tpu.core_type = #tpu.core_type<tc>, window_params = [{transform_indices = @transform_0, window_bounds = array<i64: 8, 128>}, {transform_indices = @transform_1, window_bounds = array<i64: 8, 128>}, {transform_indices = @transform_2, window_bounds = array<i64: 8, 128>}, {transform_indices = @transform_3, window_bounds = array<i64: 8, 128>}, {transform_indices = @transform_4, window_bounds = array<i64: 1, 128>}]} {
    %c0 = arith.constant 0 : index
    %c0_0 = arith.constant 0 : index
    %0 = vector.load %arg1[%c0, %c0_0] : memref<8x128xf32, #tpu.memory_space<vmem>>, vector<8x128xf32>
    %c0_1 = arith.constant 0 : index
    %c0_2 = arith.constant 0 : index
    %1 = vector.load %arg2[%c0_1, %c0_2] : memref<8x128xf32, #tpu.memory_space<vmem>>, vector<8x128xf32>
    %c0_3 = arith.constant 0 : index
    %c0_4 = arith.constant 0 : index
    %2 = vector.load %arg3[%c0_3, %c0_4] : memref<8x128xf32, #tpu.memory_space<vmem>>, vector<8x128xf32>
    %c0_5 = arith.constant 0 : index
    %c0_6 = arith.constant 0 : index
    %3 = vector.load %arg4[%c0_5, %c0_6] : memref<8x128xf32, #tpu.memory_space<vmem>>, vector<8x128xf32>
    %4 = arith.subf %0, %1 : vector<8x128xf32>
    %cst = arith.constant 9.99999997E-7 : f32
    %5 = vector.broadcast %cst : f32 to vector<8x128xf32>
    %6 = arith.addf %4, %5 : vector<8x128xf32>
    %7 = arith.mulf %6, %6 : vector<8x128xf32>
    %cst_7 = arith.constant dense<0.000000e+00> : vector<8xf32>
    %8 = vector.multi_reduction <add>, %7, %cst_7 [1] : vector<8x128xf32> to vector<8xf32>
    %9 = vector.shape_cast %8 : vector<8xf32> to vector<8x1xf32>
    %10 = arith.subf %0, %2 : vector<8x128xf32>
    %cst_8 = arith.constant 9.99999997E-7 : f32
    %11 = vector.broadcast %cst_8 : f32 to vector<8x128xf32>
    %12 = arith.addf %10, %11 : vector<8x128xf32>
    %13 = arith.mulf %12, %12 : vector<8x128xf32>
    %cst_9 = arith.constant dense<0.000000e+00> : vector<8xf32>
    %14 = vector.multi_reduction <add>, %13, %cst_9 [1] : vector<8x128xf32> to vector<8xf32>
    %15 = vector.shape_cast %14 : vector<8xf32> to vector<8x1xf32>
    %16 = arith.subf %2, %3 : vector<8x128xf32>
    %cst_10 = arith.constant 9.99999997E-7 : f32
    %17 = vector.broadcast %cst_10 : f32 to vector<8x128xf32>
    %18 = arith.addf %16, %17 : vector<8x128xf32>
    %19 = arith.mulf %18, %18 : vector<8x128xf32>
    %cst_11 = arith.constant dense<0.000000e+00> : vector<8xf32>
    %20 = vector.multi_reduction <add>, %19, %cst_11 [1] : vector<8x128xf32> to vector<8xf32>
    %21 = vector.shape_cast %20 : vector<8xf32> to vector<8x1xf32>
    %22 = arith.subf %9, %15 : vector<8x1xf32>
    %cst_12 = arith.constant 2.000000e+00 : f32
    %23 = vector.broadcast %cst_12 : f32 to vector<8x1xf32>
    %24 = arith.addf %22, %23 : vector<8x1xf32>
    %cst_13 = arith.constant 0.000000e+00 : f32
    %25 = vector.broadcast %cst_13 : f32 to vector<8x1xf32>
    %26 = arith.maximumf %24, %25 : vector<8x1xf32>
    %27 = arith.subf %9, %21 : vector<8x1xf32>
    %cst_14 = arith.constant 1.000000e+00 : f32
    %28 = vector.broadcast %cst_14 : f32 to vector<8x1xf32>
    %29 = arith.addf %27, %28 : vector<8x1xf32>
    %cst_15 = arith.constant 0.000000e+00 : f32
    %30 = vector.broadcast %cst_15 : f32 to vector<8x1xf32>
    %31 = arith.maximumf %29, %30 : vector<8x1xf32>
    %32 = arith.addf %26, %31 : vector<8x1xf32>
    %33 = vector.shape_cast %32 : vector<8x1xf32> to vector<1x8x1xf32>
    %cst_16 = arith.constant dense<0.000000e+00> : vector<1xf32>
    %34 = vector.multi_reduction <add>, %33, %cst_16 [1, 2] : vector<1x8x1xf32> to vector<1xf32>
    %35 = vector.shape_cast %34 : vector<1xf32> to vector<1x1x1xf32>
    %36 = vector.extract %35[0, 0, 0] : f32 from vector<1x1x1xf32>
    %37 = vector.broadcast %36 : f32 to vector<1x128xf32>
    %c0_17 = arith.constant 0 : index
    %c0_18 = arith.constant 0 : index
    %38 = vector.load %arg5[%c0_17, %c0_18] : memref<1x128xf32, #tpu.memory_space<vmem>>, vector<1x128xf32>
    tpu.vector_store %arg5[%c0_17, %c0_18], %37 {strides = array<i32>} : memref<1x128xf32, #tpu.memory_space<vmem>>, vector<1x128xf32>,
    return
  }
  func.func @transform_0(%arg0: i32) -> (i32, i32) {
    %c0_i32 = arith.constant 0 : i32
    %c0_i32_0 = arith.constant 0 : i32
    return %arg0, %c0_i32 : i32, i32
  }
  func.func @transform_1(%arg0: i32) -> (i32, i32) {
    %c0_i32 = arith.constant 0 : i32
    %c0_i32_0 = arith.constant 0 : i32
    return %arg0, %c0_i32 : i32, i32
  }
  func.func @transform_2(%arg0: i32) -> (i32, i32) {
    %c0_i32 = arith.constant 0 : i32
    %c0_i32_0 = arith.constant 0 : i32
    return %arg0, %c0_i32 : i32, i32
  }
  func.func @transform_3(%arg0: i32) -> (i32, i32) {
    %c0_i32 = arith.constant 0 : i32
    %c0_i32_0 = arith.constant 0 : i32
    return %arg0, %c0_i32 : i32, i32
  }
  func.func @transform_4(%arg0: i32) -> (i32, i32) {
    %c0_i32 = arith.constant 0 : i32
    %c0_i32_0 = arith.constant 0 : i32
    return %arg0, %c0_i32 : i32, i32
  }
}

</mosaic_0001>

<llo_original>
// kernel: tpu_custom_call.1
$region0: #{tpu_custom_call.1}
  #allocation0 [shape = 'u32[]', space=smem, size = 0x4, offset = 0x4, fixed_abs, tag = 'smem constant byte address 0x4 - core index']
  #allocation1 [shape = 'u32[144,128]{1,0:T(1,128)}', space=vmem, size = 0x12000, scoped, tag = 'internal scratch']
  %s0 = inlined_call_operand.hbm [shape: f32[8,128], index: 0, kind: input, shape index: {}]
  %s1 = inlined_call_operand.hbm [shape: f32[8,128], index: 1, kind: input, shape index: {}]
  %s2 = inlined_call_operand.hbm [shape: f32[8,128], index: 2, kind: input, shape index: {}]
  %s3 = inlined_call_operand.hbm [shape: f32[8,128], index: 3, kind: input, shape index: {}]
  %s4 = inlined_call_operand.hbm [shape: f32[1,128], index: 4, kind: output, shape index: {}]
  %s5 = sld [smem:[#allocation0]]
  $region42: #{tpu_custom_call.1} parent=0
    _
  %s7 = ssub.s32 1, %s5
  %s8 = scalar_select 0, %s7, %s5
  $region1: #{tpu_custom_call.1} parent=0
    #allocation2 [shape = 'u8[4096]{0}', space=vmem, size = 0x1000, scoped, tag = 'input window, operand 0, single buffered']
    #allocation3 [shape = 's32[1]{0}', space=sflag, size = 0x4, scoped, tag = 'scoped memory for tpu_custom_call.1']
    #allocation4 [shape = 's32[1]{0}', space=sflag, size = 0x4, scoped, tag = 'scoped memory for tpu_custom_call.1']
    #allocation5 [shape = 'u8[4096]{0}', space=vmem, size = 0x1000, scoped, tag = 'input window, operand 1, single buffered']
    #allocation6 [shape = 's32[1]{0}', space=sflag, size = 0x4, scoped, tag = 'scoped memory for tpu_custom_call.1']
    #allocation7 [shape = 'u8[4096]{0}', space=vmem, size = 0x1000, scoped, tag = 'input window, operand 2, single buffered']
    #allocation8 [shape = 'u8[4096]{0}', space=vmem, size = 0x1000, scoped, tag = 'input window, operand 3, single buffered']
    #allocation9 [shape = 's32[1]{0}', space=sflag, size = 0x4, scoped, tag = 'scoped memory for tpu_custom_call.1']
    #allocation10 [shape = 'u8[512]{0}', space=vmem, size = 0x400, scoped, tag = 'output window, operand 0, single buffered']
    %9 = vsyncpa [#allocation3], 0
    %10 = vsyncpa [#allocation6], 0
    %11 = vsyncpa [#allocation9], 0
    %12 = vsyncpa [#allocation4], 0
    // Predicated region
    $region2: #{tpu_custom_call.1} parent=1 // pred_check
      _
    $region3: #{tpu_custom_call.1} parent=1 // pred_check_branch
      %14 = sbr.rel (0) target = $region5
    $region4: #{tpu_custom_call.1} parent=1 // pred_region
      %s16 = ssub.s32 128, 128
      %17 = vsyncadd [#allocation3], %s16
      %s19 = sshll.u32 [#allocation2], 4
      %s20 = int_to_ptr.vmem [resolvable:$true] %s19
      %22 = dma.hbm_to_vmem [thread:$0]  %s0, 128, %s20, [#allocation3]
    $region5: #{tpu_custom_call.1} parent=1 // pred_fallthru
      _
    // Predicated region
    $region6: #{tpu_custom_call.1} parent=1 // pred_check
      _
    $region7: #{tpu_custom_call.1} parent=1 // pred_check_branch
      %24 = sbr.rel (0) target = $region9
    $region8: #{tpu_custom_call.1} parent=1 // pred_region
      %s26 = ssub.s32 128, 128
      %27 = vsyncadd [#allocation6], %s26
      %s29 = sshll.u32 [#allocation5], 4
      %s30 = int_to_ptr.vmem [resolvable:$true] %s29
      %32 = dma.hbm_to_vmem [thread:$0]  %s1, 128, %s30, [#allocation6]
    $region9: #{tpu_custom_call.1} parent=1 // pred_fallthru
      _
    // Predicated region
    $region10: #{tpu_custom_call.1} parent=1 // pred_check
      _
    $region11: #{tpu_custom_call.1} parent=1 // pred_check_branch
      %34 = sbr.rel (0) target = $region13
    $region12: #{tpu_custom_call.1} parent=1 // pred_region
      %s36 = ssub.s32 128, 128
      %37 = vsyncadd [#allocation6], %s36
      %s39 = sshll.u32 [#allocation7], 4
      %s40 = int_to_ptr.vmem [resolvable:$true] %s39
      %42 = dma.hbm_to_vmem [thread:$0]  %s2, 128, %s40, [#allocation6]
    $region13: #{tpu_custom_call.1} parent=1 // pred_fallthru
      _
    // Predicated region
    $region14: #{tpu_custom_call.1} parent=1 // pred_check
      _
    $region15: #{tpu_custom_call.1} parent=1 // pred_check_branch
      %44 = sbr.rel (0) target = $region17
    $region16: #{tpu_custom_call.1} parent=1 // pred_region
      %s46 = ssub.s32 128, 128
      %47 = vsyncadd [#allocation9], %s46
      %s49 = sshll.u32 [#allocation8], 4
      %s50 = int_to_ptr.vmem [resolvable:$true] %s49
      %52 = dma.hbm_to_vmem [thread:$0]  %s3, 128, %s50, [#allocation9]
    $region17: #{tpu_custom_call.1} parent=1 // pred_fallthru
      _
    // Predicated region
    $region18: #{tpu_custom_call.1} parent=1 // pred_check
      _
    $region19: #{tpu_custom_call.1} parent=1 // pred_check_branch
      %54 = sbr.rel (0) target = $region21
    $region20: #{tpu_custom_call.1} parent=1 // pred_region
      %55 = dma.done [#allocation3], 128
    $region21: #{tpu_custom_call.1} parent=1 // pred_fallthru
      _
    // Predicated region
    $region22: #{tpu_custom_call.1} parent=1 // pred_check
      _
    $region23: #{tpu_custom_call.1} parent=1 // pred_check_branch
      %57 = sbr.rel (0) target = $region25
    $region24: #{tpu_custom_call.1} parent=1 // pred_region
      %58 = dma.done [#allocation6], 128
    $region25: #{tpu_custom_call.1} parent=1 // pred_fallthru
      _
    // Predicated region
    $region26: #{tpu_custom_call.1} parent=1 // pred_check
      _
    $region27: #{tpu_custom_call.1} parent=1 // pred_check_branch
      %60 = sbr.rel (0) target = $region29
    $region28: #{tpu_custom_call.1} parent=1 // pred_region
      %61 = dma.done [#allocation6], 128
    $region29: #{tpu_custom_call.1} parent=1 // pred_fallthru
      _
    // Predicated region
    $region30: #{tpu_custom_call.1} parent=1 // pred_check
      _
    $region31: #{tpu_custom_call.1} parent=1 // pred_check_branch
      %63 = sbr.rel (0) target = $region33
    $region32: #{tpu_custom_call.1} parent=1 // pred_region
      %64 = dma.done [#allocation9], 128
    $region33: #{tpu_custom_call.1} parent=1 // pred_fallthru
      _
    %v65 = vld [vmem:[#allocation2] sm:$0xff]
    %v66 = vld [vmem:[#allocation5] sm:$0xff]
    %v67 = vld [vmem:[#allocation7] sm:$0xff]
    %v68 = vld [vmem:[#allocation8] sm:$0xff]
    %v69 = vsub.f32 %v65, %v66
    %v70 = vadd.f32 %v69, 1e-06
    %v71 = vmul.f32 %v70, %v70
    %72 = vadd.xlane.f32.xlu0 %v71
    %v73 = vpop.xlane.xlu0 %72
    %v74 = vsub.f32 %v65, %v67
    %v75 = vadd.f32 %v74, 1e-06
    %v76 = vmul.f32 %v75, %v75
    %77 = vadd.xlane.f32.xlu0 %v76
    %v78 = vpop.xlane.xlu0 %77
    %v79 = vsub.f32 %v67, %v68
    %v80 = vadd.f32 %v79, 1e-06
    %v81 = vmul.f32 %v80, %v80
    %82 = vadd.xlane.f32.xlu0 %v81
    %v83 = vpop.xlane.xlu0 %82
    %v84 = vsub.f32 %v73, %v78
    %v85 = vadd.f32 %v84, 2.0
    %v86 = vmax.f32 %v85, 0.0
    %v87 = vsub.f32 %v73, %v83
    %v88 = vadd.f32 %v87, 1.0
    %v89 = vmax.f32 %v88, 0.0
    %v90 = vadd.f32 %v86, %v89
    %vm91 = vcmask 7168
    %v92 = vsel %vm91, %v90, 0.0
    %93 = vadd.xlane.f32.xlu0 %v92
    %v94 = vpop.xlane.xlu0 %93
    %v95 = vrot.slane %v94, 4
    %v96 = vadd.f32 %v94, %v95
    %v97 = vrot.slane %v96, 2
    %v98 = vadd.f32 %v96, %v97
    %v99 = vrot.slane %v98, 1
    %v100 = vadd.f32 %v98, %v99
    %s101 = vtos %v100
    %v102 = vstv %s101
    %103 = vst [vmem:[#allocation10] sm:$0x1] %v102
    // Predicated region
    $region34: #{tpu_custom_call.1} parent=1 // pred_check
      _
    $region35: #{tpu_custom_call.1} parent=1 // pred_check_branch
      %105 = sbr.rel (0) target = $region37
    $region36: #{tpu_custom_call.1} parent=1 // pred_region
      %s107 = ssub.s32 16, 16
      %108 = vsyncadd [#allocation4], %s107
      %s110 = sshll.u32 [#allocation10], 4
      %s111 = int_to_ptr.vmem [resolvable:$true] %s110
      %113 = dma.vmem_to_hbm [thread:$0]  %s111, 16, %s4, [#allocation4]
    $region37: #{tpu_custom_call.1} parent=1 // pred_fallthru
      _
    // Predicated region
    $region38: #{tpu_custom_call.1} parent=1 // pred_check
      _
    $region39: #{tpu_custom_call.1} parent=1 // pred_check_branch
      %115 = sbr.rel (0) target = $region41
    $region40: #{tpu_custom_call.1} parent=1 // pred_region
      %116 = dma.done [#allocation4], 16
    $region41: #{tpu_custom_call.1} parent=1 // pred_fallthru
      _
    %117 = vsyncpa [#allocation3], 1
    %118 = vsyncpa [#allocation6], 1
    %119 = vsyncpa [#allocation9], 1
    %120 = vsyncpa [#allocation4], 1

</llo_original>
